<compile_context>
chip_gen: v7x
topology: tpu7x:2x2x1
jax: 0.10.0
libtpu: 0.0.40
codegen_flags: <defaults>
</compile_context>

<pallas_src>
import jax
import jax.numpy as jnp
from jax.experimental import pallas as pl
from jax.experimental.pallas import tpu as pltpu

IMAGE_SIZE = 784
HIDDEN_PAD = 128                 # every hidden / output width padded to 128 lanes
NUM_CLASSES = 10
LAYER_DIMS = [(IMAGE_SIZE, 128), (128, 64), (64, 10), (10, 10), (10, 10), (10, 10)]
TM_MAX = 2048                    # batch tile cap (amortizes ~0.35us per-step overhead)


def _round_up(x, m):
    return (x + m - 1) // m * m


def _mlp_kernel(x_ref, w0_ref, ws_ref, b_ref, o_ref):
    """One batch tile: 5x (Linear+ReLU) + Linear + masked log_softmax.

    x_ref:  (TM, 784)      f32   (cast to bf16 here, no host pad/cast)
    w0_ref: (784, 128)     bf16
    ws_ref: (5, 128, 128)  bf16  (W1..W5, zero-padded to 128x128)
    b_ref:  (8, 128)       f32   (row l = bias of layer l, zero-padded)
    o_ref:  (TM, 128)      f32   (first 10 lanes are the real log-probs)
    """
    h = x_ref[...].astype(jnp.bfloat16)                      # (TM, 784) bf16

    # Layer 0: 784-contraction matmul on the MXU, f32 accumulation.
    z = jnp.dot(h, w0_ref[...], preferred_element_type=jnp.float32) + b_ref[0:1, :]
    h = jnp.maximum(z, 0.0).astype(jnp.bfloat16)             # bf16 intermediates

    # Layers 1..4: Linear + bias + ReLU (128x128 padded weights).
    for l in range(4):
        z = jnp.dot(h, ws_ref[l], preferred_element_type=jnp.float32) \
            + b_ref[l + 1:l + 2, :]
        h = jnp.maximum(z, 0.0).astype(jnp.bfloat16)

    # Final linear -> (TM, 128) logits (only first NUM_CLASSES lanes are real).
    logits = jnp.dot(h, ws_ref[4], preferred_element_type=jnp.float32) + b_ref[5:6, :]

    # Numerically stable log_softmax restricted to the first NUM_CLASSES lanes.
    col = jax.lax.broadcasted_iota(jnp.int32, logits.shape, 1)
    valid = col < NUM_CLASSES
    m = jnp.max(jnp.where(valid, logits, -1e30), axis=-1, keepdims=True)
    shifted = logits - m
    sumexp = jnp.sum(jnp.where(valid, jnp.exp(shifted), 0.0),
                     axis=-1, keepdims=True)
    o_ref[...] = (shifted - jnp.log(sumexp)).astype(o_ref.dtype)


@jax.jit
def e_forward(x, packed):
    """packed = (W0 (784,128) bf16, Wstack (5,128,128) bf16, biases (8,128) f32).

    Returns (B, 10) f32 log-probs."""
    w0, wstack, biases = packed

    x2d = x.reshape(-1, IMAGE_SIZE)          # no pad, no cast -> no extra HBM copy
    batch = x2d.shape[0]

    # Batch tile: ~batch/2 (>=2 grid steps for megacore), multiple of 8, <= TM_MAX.
    tm = min(TM_MAX, max(8, _round_up(-(-batch // 2), 8)))
    grid = (pl.cdiv(batch, tm),)

    flops = 2 * batch * sum(k * n for k, n in LAYER_DIMS)
    bytes_accessed = (
        int(x2d.size) * x2d.dtype.itemsize
        + int(w0.size) * w0.dtype.itemsize
        + int(wstack.size) * wstack.dtype.itemsize
        + int(biases.size) * biases.dtype.itemsize
        + batch * HIDDEN_PAD * 4
    )

    out = pl.pallas_call(
        _mlp_kernel,
        out_shape=jax.ShapeDtypeStruct((batch, HIDDEN_PAD), jnp.float32),
        grid=grid,
        in_specs=[
            pl.BlockSpec((tm, IMAGE_SIZE), lambda i: (i, 0)),           # x tile (f32)
            pl.BlockSpec((IMAGE_SIZE, HIDDEN_PAD), lambda i: (0, 0)),   # W0 (resident)
            pl.BlockSpec((5, HIDDEN_PAD, HIDDEN_PAD),
                         lambda i: (0, 0, 0)),                          # W1..W5 (resident)
            pl.BlockSpec((8, HIDDEN_PAD), lambda i: (0, 0)),            # packed biases
        ],
        out_specs=pl.BlockSpec((tm, HIDDEN_PAD), lambda i: (i, 0)),
        compiler_params=pltpu.CompilerParams(
            dimension_semantics=("parallel",),
            vmem_limit_bytes=48 * 1024 * 1024,
        ),
        cost_estimate=pl.CostEstimate(
            flops=flops,
            transcendentals=batch * HIDDEN_PAD,
            bytes_accessed=bytes_accessed,
        ),
    )(x2d, w0, wstack, biases)

    return out[:, :NUM_CLASSES]


def init_params(key):
    """Deterministic init mimicking nn.Linear's uniform(-1/sqrt(fan_in), +).

    Weights stored as (in_features, out_features) f32; biases as (out,)."""
    params = []
    for (fan_in, fan_out) in LAYER_DIMS:
        key, kw, kb = jax.random.split(key, 3)
        bound = 1.0 / jnp.sqrt(fan_in)
        w = jax.random.uniform(kw, (fan_in, fan_out), jnp.float32, -bound, bound)
        b = jax.random.uniform(kb, (fan_out,), jnp.float32, -bound, bound)
        params.append((w, b))
    return params


def pack_params(params):
    """W0 -> (784,128) bf16 (no pad); W1..W5 -> stacked (5,128,128) bf16 zero-padded;
    biases -> (8,128) f32 zero-padded."""
    def pad_w(w):
        out = jnp.zeros((HIDDEN_PAD, HIDDEN_PAD), jnp.bfloat16)
        return out.at[:w.shape[0], :w.shape[1]].set(w.astype(jnp.bfloat16))

    w0 = params[0][0].astype(jnp.bfloat16)                       # exactly (784, 128)
    wstack = jnp.stack([pad_w(w) for (w, _) in params[1:]], axis=0)
    biases = jnp.zeros((8, HIDDEN_PAD), jnp.float32)
    for i, (_, b) in enumerate(params):
        biases = biases.at[i, :b.shape[0]].set(b)
    return (w0, wstack, biases)


def reference_forward(x, params):
    """Pure-JAX reference mirroring the kernel's numerics (bf16 dots, f32 accum)."""
    h = x.reshape(-1, IMAGE_SIZE)
    for i, (w, b) in enumerate(params):
        h = jnp.dot(h.astype(jnp.bfloat16), w.astype(jnp.bfloat16),
                    preferred_element_type=jnp.float32) + b
        if i < len(params) - 1:
            h = jnp.maximum(h, 0.0)
    return jax.nn.log_softmax(h, axis=-1)


if __name__ == "__main__":
    key = jax.random.PRNGKey(0)
    key, kx = jax.random.split(key)

    # Small MNIST-like batch: (2, 1, 28, 28) -> view(-1, 784)
    x = jax.random.normal(kx, (2, 1, 28, 28), jnp.float32)
    params = init_params(key)
    packed = pack_params(params)

    out = jax.block_until_ready(e_forward(x, packed))

    ref = reference_forward(x, params)
    assert out.shape == (2, NUM_CLASSES), out.shape
    assert jnp.allclose(out, ref, atol=1e-3, rtol=1e-3), "mismatch vs reference"

    print("KERNEL_OK")
</pallas_src>

<mosaic_0001>
module attributes {stable_mosaic.version = 11 : i64} {
  func.func @_mlp_kernel(%arg0: i32, %arg1: memref<8x784xf32, #tpu.memory_space<vmem>>, %arg2: memref<784x128xbf16, #tpu.memory_space<vmem>>, %arg3: memref<5x128x128xbf16, #tpu.memory_space<vmem>>, %arg4: memref<8x128xf32, #tpu.memory_space<vmem>>, %arg5: memref<8x128xf32, #tpu.memory_space<vmem>>) attributes {dimension_semantics = [#tpu.dimension_semantics<parallel>], iteration_bounds = array<i64: 1>, scalar_prefetch = 0 : i64, scratch_operands = 0 : i64, tpu.core_type = #tpu.core_type<tc>, window_params = [{transform_indices = @transform_0, window_bounds = array<i64: 8, 784>}, {pipeline_mode = #tpu.pipeline_mode<synchronous>, transform_indices = @transform_1, window_bounds = array<i64: 784, 128>}, {pipeline_mode = #tpu.pipeline_mode<synchronous>, transform_indices = @transform_2, window_bounds = array<i64: 5, 128, 128>}, {pipeline_mode = #tpu.pipeline_mode<synchronous>, transform_indices = @transform_3, window_bounds = array<i64: 8, 128>}, {transform_indices = @transform_4, window_bounds = array<i64: 8, 128>}]} {
    %c0 = arith.constant 0 : index
    %c0_0 = arith.constant 0 : index
    %0 = vector.load %arg1[%c0, %c0_0] : memref<8x784xf32, #tpu.memory_space<vmem>>, vector<8x784xf32>
    %1 = arith.truncf %0 : vector<8x784xf32> to vector<8x784xbf16>
    %c0_1 = arith.constant 0 : index
    %c0_2 = arith.constant 0 : index
    %2 = vector.load %arg2[%c0_1, %c0_2] : memref<784x128xbf16, #tpu.memory_space<vmem>>, vector<784x128xbf16>
    %cst = arith.constant dense<0.000000e+00> : vector<8x128xf32>
    %3 = tpu.matmul %1, %2, %cst {dimension_numbers = #tpu.dot_dimension_numbers<[1], [0], [0], [1], [0, 0, 1, 1], [], []>} : vector<8x784xbf16>, vector<784x128xbf16>, vector<8x128xf32> -> vector<8x128xf32>
    %c0_3 = arith.constant 0 : index
    %c0_4 = arith.constant 0 : index
    %4 = vector.load %arg4[%c0_3, %c0_4] : memref<8x128xf32, #tpu.memory_space<vmem>>, vector<1x128xf32>
    %5 = vector.broadcast %4 : vector<1x128xf32> to vector<8x128xf32>
    %6 = arith.addf %3, %5 : vector<8x128xf32>
    %cst_5 = arith.constant 0.000000e+00 : f32
    %7 = vector.broadcast %cst_5 : f32 to vector<8x128xf32>
    %8 = arith.maximumf %6, %7 : vector<8x128xf32>
    %9 = arith.truncf %8 : vector<8x128xf32> to vector<8x128xbf16>
    %c0_6 = arith.constant 0 : index
    %c0_7 = arith.constant 0 : index
    %c0_8 = arith.constant 0 : index
    %10 = vector.load %arg3[%c0_6, %c0_7, %c0_8] : memref<5x128x128xbf16, #tpu.memory_space<vmem>>, vector<1x128x128xbf16>
    %11 = vector.shape_cast %10 : vector<1x128x128xbf16> to vector<128x128xbf16>
    %cst_9 = arith.constant dense<0.000000e+00> : vector<8x128xf32>
    %12 = tpu.matmul %9, %11, %cst_9 {dimension_numbers = #tpu.dot_dimension_numbers<[1], [0], [0], [1], [0, 0, 1, 1], [], []>} : vector<8x128xbf16>, vector<128x128xbf16>, vector<8x128xf32> -> vector<8x128xf32>
    %c1 = arith.constant 1 : index
    %c0_10 = arith.constant 0 : index
    %13 = vector.load %arg4[%c1, %c0_10] : memref<8x128xf32, #tpu.memory_space<vmem>>, vector<1x128xf32>
    %14 = vector.broadcast %13 : vector<1x128xf32> to vector<8x128xf32>
    %15 = arith.addf %12, %14 : vector<8x128xf32>
    %cst_11 = arith.constant 0.000000e+00 : f32
    %16 = vector.broadcast %cst_11 : f32 to vector<8x128xf32>
    %17 = arith.maximumf %15, %16 : vector<8x128xf32>
    %18 = arith.truncf %17 : vector<8x128xf32> to vector<8x128xbf16>
    %c1_12 = arith.constant 1 : index
    %c0_13 = arith.constant 0 : index
    %c0_14 = arith.constant 0 : index
    %19 = vector.load %arg3[%c1_12, %c0_13, %c0_14] : memref<5x128x128xbf16, #tpu.memory_space<vmem>>, vector<1x128x128xbf16>
    %20 = vector.shape_cast %19 : vector<1x128x128xbf16> to vector<128x128xbf16>
    %cst_15 = arith.constant dense<0.000000e+00> : vector<8x128xf32>
    %21 = tpu.matmul %18, %20, %cst_15 {dimension_numbers = #tpu.dot_dimension_numbers<[1], [0], [0], [1], [0, 0, 1, 1], [], []>} : vector<8x128xbf16>, vector<128x128xbf16>, vector<8x128xf32> -> vector<8x128xf32>
    %c2 = arith.constant 2 : index
    %c0_16 = arith.constant 0 : index
    %22 = vector.load %arg4[%c2, %c0_16] : memref<8x128xf32, #tpu.memory_space<vmem>>, vector<1x128xf32>
    %23 = vector.broadcast %22 : vector<1x128xf32> to vector<8x128xf32>
    %24 = arith.addf %21, %23 : vector<8x128xf32>
    %cst_17 = arith.constant 0.000000e+00 : f32
    %25 = vector.broadcast %cst_17 : f32 to vector<8x128xf32>
    %26 = arith.maximumf %24, %25 : vector<8x128xf32>
    %27 = arith.truncf %26 : vector<8x128xf32> to vector<8x128xbf16>
    %c2_18 = arith.constant 2 : index
    %c0_19 = arith.constant 0 : index
    %c0_20 = arith.constant 0 : index
    %28 = vector.load %arg3[%c2_18, %c0_19, %c0_20] : memref<5x128x128xbf16, #tpu.memory_space<vmem>>, vector<1x128x128xbf16>
    %29 = vector.shape_cast %28 : vector<1x128x128xbf16> to vector<128x128xbf16>
    %cst_21 = arith.constant dense<0.000000e+00> : vector<8x128xf32>
    %30 = tpu.matmul %27, %29, %cst_21 {dimension_numbers = #tpu.dot_dimension_numbers<[1], [0], [0], [1], [0, 0, 1, 1], [], []>} : vector<8x128xbf16>, vector<128x128xbf16>, vector<8x128xf32> -> vector<8x128xf32>
    %c3 = arith.constant 3 : index
    %c0_22 = arith.constant 0 : index
    %31 = vector.load %arg4[%c3, %c0_22] : memref<8x128xf32, #tpu.memory_space<vmem>>, vector<1x128xf32>
    %32 = vector.broadcast %31 : vector<1x128xf32> to vector<8x128xf32>
    %33 = arith.addf %30, %32 : vector<8x128xf32>
    %cst_23 = arith.constant 0.000000e+00 : f32
    %34 = vector.broadcast %cst_23 : f32 to vector<8x128xf32>
    %35 = arith.maximumf %33, %34 : vector<8x128xf32>
    %36 = arith.truncf %35 : vector<8x128xf32> to vector<8x128xbf16>
    %c3_24 = arith.constant 3 : index
    %c0_25 = arith.constant 0 : index
    %c0_26 = arith.constant 0 : index
    %37 = vector.load %arg3[%c3_24, %c0_25, %c0_26] : memref<5x128x128xbf16, #tpu.memory_space<vmem>>, vector<1x128x128xbf16>
    %38 = vector.shape_cast %37 : vector<1x128x128xbf16> to vector<128x128xbf16>
    %cst_27 = arith.constant dense<0.000000e+00> : vector<8x128xf32>
    %39 = tpu.matmul %36, %38, %cst_27 {dimension_numbers = #tpu.dot_dimension_numbers<[1], [0], [0], [1], [0, 0, 1, 1], [], []>} : vector<8x128xbf16>, vector<128x128xbf16>, vector<8x128xf32> -> vector<8x128xf32>
    %c4 = arith.constant 4 : index
    %c0_28 = arith.constant 0 : index
    %40 = vector.load %arg4[%c4, %c0_28] : memref<8x128xf32, #tpu.memory_space<vmem>>, vector<1x128xf32>
    %41 = vector.broadcast %40 : vector<1x128xf32> to vector<8x128xf32>
    %42 = arith.addf %39, %41 : vector<8x128xf32>
    %cst_29 = arith.constant 0.000000e+00 : f32
    %43 = vector.broadcast %cst_29 : f32 to vector<8x128xf32>
    %44 = arith.maximumf %42, %43 : vector<8x128xf32>
    %45 = arith.truncf %44 : vector<8x128xf32> to vector<8x128xbf16>
    %c4_30 = arith.constant 4 : index
    %c0_31 = arith.constant 0 : index
    %c0_32 = arith.constant 0 : index
    %46 = vector.load %arg3[%c4_30, %c0_31, %c0_32] : memref<5x128x128xbf16, #tpu.memory_space<vmem>>, vector<1x128x128xbf16>
    %47 = vector.shape_cast %46 : vector<1x128x128xbf16> to vector<128x128xbf16>
    %cst_33 = arith.constant dense<0.000000e+00> : vector<8x128xf32>
    %48 = tpu.matmul %45, %47, %cst_33 {dimension_numbers = #tpu.dot_dimension_numbers<[1], [0], [0], [1], [0, 0, 1, 1], [], []>} : vector<8x128xbf16>, vector<128x128xbf16>, vector<8x128xf32> -> vector<8x128xf32>
    %c5 = arith.constant 5 : index
    %c0_34 = arith.constant 0 : index
    %49 = vector.load %arg4[%c5, %c0_34] : memref<8x128xf32, #tpu.memory_space<vmem>>, vector<1x128xf32>
    %50 = vector.broadcast %49 : vector<1x128xf32> to vector<8x128xf32>
    %51 = arith.addf %48, %50 : vector<8x128xf32>
    %52 = tpu.iota {dimensions = array<i32: 1>} : vector<8x128xi32>
    %c10_i32 = arith.constant 10 : i32
    %53 = vector.broadcast %c10_i32 : i32 to vector<8x128xi32>
    %54 = arith.cmpi slt, %52, %53 : vector<8x128xi32>
    %cst_35 = arith.constant -1.000000e+30 : f32
    %55 = vector.broadcast %cst_35 : f32 to vector<8x128xf32>
    %56 = arith.select %54, %51, %55 : vector<8x128xi1>, vector<8x128xf32>
    %cst_36 = arith.constant dense<0xFF800000> : vector<8xf32>
    %57 = vector.multi_reduction <maximumf>, %56, %cst_36 [1] : vector<8x128xf32> to vector<8xf32>
    %58 = vector.shape_cast %57 : vector<8xf32> to vector<8x1xf32>
    %59 = vector.broadcast %58 : vector<8x1xf32> to vector<8x128xf32>
    %60 = arith.subf %51, %59 : vector<8x128xf32>
    %61 = math.exp %60 : vector<8x128xf32>
    %cst_37 = arith.constant 0.000000e+00 : f32
    %62 = vector.broadcast %cst_37 : f32 to vector<8x128xf32>
    %63 = arith.select %54, %61, %62 : vector<8x128xi1>, vector<8x128xf32>
    %cst_38 = arith.constant dense<0.000000e+00> : vector<8xf32>
    %64 = vector.multi_reduction <add>, %63, %cst_38 [1] : vector<8x128xf32> to vector<8xf32>
    %65 = vector.shape_cast %64 : vector<8xf32> to vector<8x1xf32>
    %66 = math.log %65 : vector<8x1xf32>
    %67 = vector.broadcast %66 : vector<8x1xf32> to vector<8x128xf32>
    %68 = arith.subf %60, %67 : vector<8x128xf32>
    %c0_39 = arith.constant 0 : index
    %c0_40 = arith.constant 0 : index
    %69 = vector.load %arg5[%c0_39, %c0_40] : memref<8x128xf32, #tpu.memory_space<vmem>>, vector<8x128xf32>
    tpu.vector_store %arg5[%c0_39, %c0_40], %68 {strides = array<i32>} : memref<8x128xf32, #tpu.memory_space<vmem>>, vector<8x128xf32>,
    return
  }
  func.func @transform_0(%arg0: i32) -> (i32, i32) {
    %c0_i32 = arith.constant 0 : i32
    %c0_i32_0 = arith.constant 0 : i32
    return %arg0, %c0_i32 : i32, i32
  }
  func.func @transform_1(%arg0: i32) -> (i32, i32) {
    %c0_i32 = arith.constant 0 : i32
    %c0_i32_0 = arith.constant 0 : i32
    %c0_i32_1 = arith.constant 0 : i32
    return %c0_i32, %c0_i32_0 : i32, i32
  }
  func.func @transform_2(%arg0: i32) -> (i32, i32, i32) {
    %c0_i32 = arith.constant 0 : i32
    %c0_i32_0 = arith.constant 0 : i32
    %c0_i32_1 = arith.constant 0 : i32
    %c0_i32_2 = arith.constant 0 : i32
    return %c0_i32, %c0_i32_0, %c0_i32_1 : i32, i32, i32
  }
  func.func @transform_3(%arg0: i32) -> (i32, i32) {
    %c0_i32 = arith.constant 0 : i32
    %c0_i32_0 = arith.constant 0 : i32
    %c0_i32_1 = arith.constant 0 : i32
    return %c0_i32, %c0_i32_0 : i32, i32
  }
  func.func @transform_4(%arg0: i32) -> (i32, i32) {
    %c0_i32 = arith.constant 0 : i32
    %c0_i32_0 = arith.constant 0 : i32
    return %arg0, %c0_i32 : i32, i32
  }
}

</mosaic_0001>

<llo_original>
// kernel: e_forward.1
$region0: #{e_forward.1}
  #allocation0 [shape = 'u32[]', space=smem, size = 0x4, offset = 0x4, fixed_abs, tag = 'smem constant byte address 0x4 - core index']
  #allocation1 [shape = 'u32[144,128]{1,0:T(1,128)}', space=vmem, size = 0x12000, scoped, tag = 'internal scratch']
  %s0 = inlined_call_operand.vmem [shape: f32[2,784], index: 0, kind: input, shape index: {}]
  %s1 = inlined_call_operand.hbm [shape: bf16[784,128], index: 1, kind: input, shape index: {}]
  %s2 = inlined_call_operand.hbm [shape: bf16[5,128,128], index: 2, kind: input, shape index: {}]
  %s3 = inlined_call_operand.vmem [shape: f32[8,128], index: 3, kind: input, shape index: {}]
  %s4 = inlined_call_operand.hbm [shape: f32[2,128], index: 4, kind: output, shape index: {}]
  %s5 = sld [smem:[#allocation0]]
  $region34: #{e_forward.1} parent=0
    _
  %s7 = ssub.s32 1, %s5
  %s8 = scalar_select 0, %s7, %s5
  $region1: #{e_forward.1} parent=0
    #allocation2 [shape = 'u8[200704]{0}', space=vmem, size = 0x31000, scoped, tag = 'input window, operand 1, single buffered']
    #allocation3 [shape = 's32[1]{0}', space=sflag, size = 0x4, scoped, tag = 'scoped memory for e_forward.1']
    #allocation4 [shape = 's32[1]{0}', space=sflag, size = 0x4, scoped, tag = 'scoped memory for e_forward.1']
    #allocation5 [shape = 'u8[163840]{0}', space=vmem, size = 0x28000, scoped, tag = 'input window, operand 2, single buffered']
    #allocation6 [shape = 's32[1]{0}', space=sflag, size = 0x4, scoped, tag = 'scoped memory for e_forward.1']
    #allocation7 [shape = 'u8[4096]{0}', space=vmem, size = 0x1000, scoped, tag = 'output window, operand 0, single buffered']
    %9 = vsyncpa [#allocation3], 0
    %10 = vsyncpa [#allocation6], 0
    %11 = vsyncpa [#allocation4], 0
    // Predicated region
    $region2: #{e_forward.1} parent=1 // pred_check
      _
    $region3: #{e_forward.1} parent=1 // pred_check_branch
      %13 = sbr.rel (0) target = $region5
    $region4: #{e_forward.1} parent=1 // pred_region
      _
    $region5: #{e_forward.1} parent=1 // pred_fallthru
      _
    // Predicated region
    $region6: #{e_forward.1} parent=1 // pred_check
      _
    $region7: #{e_forward.1} parent=1 // pred_check_branch
      %15 = sbr.rel (0) target = $region9
    $region8: #{e_forward.1} parent=1 // pred_region
      %s17 = ssub.s32 6272, 6272
      %18 = vsyncadd [#allocation3], %s17
      %s19 = sshll.u32 [#allocation2], 4
      %s20 = int_to_ptr.vmem [resolvable:$true] %s19
      %25 = dma.hbm_to_vmem [thread:$0]  %s1, 6272, %s20, [#allocation3], 64, 64, 4
    $region9: #{e_forward.1} parent=1 // pred_fallthru
      _
    // Predicated region
    $region10: #{e_forward.1} parent=1 // pred_check
      _
    $region11: #{e_forward.1} parent=1 // pred_check_branch
      %27 = sbr.rel (0) target = $region13
    $region12: #{e_forward.1} parent=1 // pred_region
      %s29 = ssub.s32 5120, 5120
      %30 = vsyncadd [#allocation6], %s29
      %s31 = sshll.u32 [#allocation5], 4
      %s32 = int_to_ptr.vmem [resolvable:$true] %s31
      %37 = dma.hbm_to_vmem [thread:$0]  %s2, 5120, %s32, [#allocation6], 64, 64, 4
    $region13: #{e_forward.1} parent=1 // pred_fallthru
      _
    // Predicated region
    $region14: #{e_forward.1} parent=1 // pred_check
      _
    $region15: #{e_forward.1} parent=1 // pred_check_branch
      %39 = sbr.rel (0) target = $region17
    $region16: #{e_forward.1} parent=1 // pred_region
      _
    $region17: #{e_forward.1} parent=1 // pred_fallthru
      _
    // Predicated region
    $region18: #{e_forward.1} parent=1 // pred_check
      _
    $region19: #{e_forward.1} parent=1 // pred_check_branch
      %41 = sbr.rel (0) target = $region21
    $region20: #{e_forward.1} parent=1 // pred_region
      %42 = dma.done [#allocation3], 6272
    $region21: #{e_forward.1} parent=1 // pred_fallthru
      _
    // Predicated region
    $region22: #{e_forward.1} parent=1 // pred_check
      _
    $region23: #{e_forward.1} parent=1 // pred_check_branch
      %44 = sbr.rel (0) target = $region25
    $region24: #{e_forward.1} parent=1 // pred_region
      %45 = dma.done [#allocation6], 5120
    $region25: #{e_forward.1} parent=1 // pred_fallthru
      _
    %v47 = vld [vmem:[%s0] sm:$0xff]
    %v48 = vld [vmem:[%s0 + $0x8] sm:$0x3f]
    %v49 = vld [vmem:[%s0 + $0xe] sm:$0xff]
    %v50 = vld [vmem:[%s0 + $0x16] sm:$0x3f]
    %v51 = vld [vmem:[%s0 + $0x1c] sm:$0xff]
    %v52 = vld [vmem:[%s0 + $0x24] sm:$0x3f]
    %v53 = vld [vmem:[%s0 + $0x2a] sm:$0xff]
    %v54 = vld [vmem:[%s0 + $0x32] sm:$0x3f]
    %v63 = vcombine.low %v47, %v49
    %v64 = vcombine.high %v47, %v49
    %v65 = vcombine.low %v51, %v53
    %v66 = vcombine.high %v51, %v53
    %v68 = vunpack.c.l.s4 1983009808
    %v69 = vunpack.c.0.s8 %v68
    %v70 = vlaneseq
    %v71 = vshrl.u32 %v70, 7
    %v72 = vsub.s32 %v69, %v71
    %v73 = vrot.slane %v63, %v72
    %v75 = vunpack.c.l.s4 1983009808
    %v76 = vunpack.c.0.s8 %v75
    %v77 = vlaneseq
    %v78 = vshrl.u32 %v77, 7
    %v79 = vsub.s32 %v76, %v78
    %v80 = vrot.slane %v64, %v79
    %v82 = vunpack.c.l.s4 1983009808
    %v83 = vunpack.c.0.s8 %v82
    %v84 = vlaneseq
    %v85 = vshrl.u32 %v84, 7
    %v86 = vsub.s32 %v83, %v85
    %v87 = vrot.slane %v65, %v86
    %v89 = vunpack.c.l.s4 1983009808
    %v90 = vunpack.c.0.s8 %v89
    %v91 = vlaneseq
    %v92 = vshrl.u32 %v91, 7
    %v93 = vsub.s32 %v90, %v92
    %v94 = vrot.slane %v66, %v93
    %v95 = vcombine.low %v73, %v87
    %v96 = vcombine.high %v73, %v87
    %v97 = vcombine.low %v80, %v94
    %v98 = vcombine.high %v80, %v94
    %v99 = vcombine.low %v48, %v50
    %v100 = vcombine.high %v48, %v50
    %v101 = vcombine.low %v52, %v54
    %v102 = vcombine.high %v52, %v54
    %v104 = vunpack.c.l.s4 1983009808
    %v105 = vunpack.c.0.s8 %v104
    %v106 = vlaneseq
    %v107 = vshrl.u32 %v106, 7
    %v108 = vsub.s32 %v105, %v107
    %v109 = vrot.slane %v99, %v108
    %v111 = vunpack.c.l.s4 1983009808
    %v112 = vunpack.c.0.s8 %v111
    %v113 = vlaneseq
    %v114 = vshrl.u32 %v113, 7
    %v115 = vsub.s32 %v112, %v114
    %v116 = vrot.slane %v100, %v115
    %v118 = vunpack.c.l.s4 1983009808
    %v119 = vunpack.c.0.s8 %v118
    %v120 = vlaneseq
    %v121 = vshrl.u32 %v120, 7
    %v122 = vsub.s32 %v119, %v121
    %v123 = vrot.slane %v101, %v122
    %v125 = vunpack.c.l.s4 1983009808
    %v126 = vunpack.c.0.s8 %v125
    %v127 = vlaneseq
    %v128 = vshrl.u32 %v127, 7
    %v129 = vsub.s32 %v126, %v128
    %v130 = vrot.slane %v102, %v129
    %v131 = vcombine.low %v109, %v123
    %v132 = vcombine.high %v109, %v123
    %v133 = vcombine.low %v116, %v130
    %v141 = vpack.c.bf16 %v95, %v95
    %v142 = vpack.c.bf16 %v96, %v96
    %v143 = vpack.c.bf16 %v97, %v97
    %v144 = vpack.c.bf16 %v98, %v98
    %v145 = vpack.c.bf16 %v131, %v131
    %v146 = vpack.c.bf16 %v132, %v132
    %v147 = vpack.c.bf16 %v133, %v133
    %v148 = vld [vmem:[#allocation2] sm:$0xf]
    %v149 = vld [vmem:[#allocation2 + $0x4] sm:$0xf]
    %v150 = vld [vmem:[#allocation2 + $0x8] sm:$0xf]
    %v151 = vld [vmem:[#allocation2 + $0xc] sm:$0xf]
    %v152 = vld [vmem:[#allocation2 + $0x10] sm:$0xf]
    %v153 = vld [vmem:[#allocation2 + $0x14] sm:$0xf]
    %v154 = vld [vmem:[#allocation2 + $0x18] sm:$0xf]
    %v155 = vld [vmem:[#allocation2 + $0x1c] sm:$0xf]
    %v156 = vld [vmem:[#allocation2 + $0x20] sm:$0xf]
    %v157 = vld [vmem:[#allocation2 + $0x24] sm:$0xf]
    %v158 = vld [vmem:[#allocation2 + $0x28] sm:$0xf]
    %v159 = vld [vmem:[#allocation2 + $0x2c] sm:$0xf]
    %v160 = vld [vmem:[#allocation2 + $0x30] sm:$0xf]
    %v161 = vld [vmem:[#allocation2 + $0x34] sm:$0xf]
    %v162 = vld [vmem:[#allocation2 + $0x38] sm:$0xf]
    %v163 = vld [vmem:[#allocation2 + $0x3c] sm:$0xf]
    %v164 = vld [vmem:[#allocation2 + $0x40] sm:$0xf]
    %v165 = vld [vmem:[#allocation2 + $0x44] sm:$0xf]
    %v166 = vld [vmem:[#allocation2 + $0x48] sm:$0xf]
    %v167 = vld [vmem:[#allocation2 + $0x4c] sm:$0xf]
    %v168 = vld [vmem:[#allocation2 + $0x50] sm:$0xf]
    %v169 = vld [vmem:[#allocation2 + $0x54] sm:$0xf]
    %v170 = vld [vmem:[#allocation2 + $0x58] sm:$0xf]
    %v171 = vld [vmem:[#allocation2 + $0x5c] sm:$0xf]
    %v172 = vld [vmem:[#allocation2 + $0x60] sm:$0xf]
    %v173 = vld [vmem:[#allocation2 + $0x64] sm:$0xf]
    %v174 = vld [vmem:[#allocation2 + $0x68] sm:$0xf]
    %v175 = vld [vmem:[#allocation2 + $0x6c] sm:$0xf]
    %v176 = vld [vmem:[#allocation2 + $0x70] sm:$0xf]
    %v177 = vld [vmem:[#allocation2 + $0x74] sm:$0xf]
    %v178 = vld [vmem:[#allocation2 + $0x78] sm:$0xf]
    %v179 = vld [vmem:[#allocation2 + $0x7c] sm:$0xf]
    %v180 = vld [vmem:[#allocation2 + $0x80] sm:$0xf]
    %v181 = vld [vmem:[#allocation2 + $0x84] sm:$0xf]
    %v182 = vld [vmem:[#allocation2 + $0x88] sm:$0xf]
    %v183 = vld [vmem:[#allocation2 + $0x8c] sm:$0xf]
    %v184 = vld [vmem:[#allocation2 + $0x90] sm:$0xf]
    %v185 = vld [vmem:[#allocation2 + $0x94] sm:$0xf]
    %v186 = vld [vmem:[#allocation2 + $0x98] sm:$0xf]
    %v187 = vld [vmem:[#allocation2 + $0x9c] sm:$0xf]
    %v188 = vld [vmem:[#allocation2 + $0xa0] sm:$0xf]
    %v189 = vld [vmem:[#allocation2 + $0xa4] sm:$0xf]
    %v190 = vld [vmem:[#allocation2 + $0xa8] sm:$0xf]
    %v191 = vld [vmem:[#allocation2 + $0xac] sm:$0xf]
    %v192 = vld [vmem:[#allocation2 + $0xb0] sm:$0xf]
    %v193 = vld [vmem:[#allocation2 + $0xb4] sm:$0xf]
    %v194 = vld [vmem:[#allocation2 + $0xb8] sm:$0xf]
    %v195 = vld [vmem:[#allocation2 + $0xbc] sm:$0xf]
    %v196 = vld [vmem:[#allocation2 + $0xc0] sm:$0xf]
    %v197 = vld [vmem:[#allocation2 + $0xc4] sm:$0xf]
    %v198 = vld [vmem:[#allocation2 + $0xc8] sm:$0xf]
    %v199 = vld [vmem:[#allocation2 + $0xcc] sm:$0xf]
    %v200 = vld [vmem:[#allocation2 + $0xd0] sm:$0xf]
    %v201 = vld [vmem:[#allocation2 + $0xd4] sm:$0xf]
    %v202 = vld [vmem:[#allocation2 + $0xd8] sm:$0xf]
    %v203 = vld [vmem:[#allocation2 + $0xdc] sm:$0xf]
    %v204 = vld [vmem:[#allocation2 + $0xe0] sm:$0xf]
    %v205 = vld [vmem:[#allocation2 + $0xe4] sm:$0xf]
    %v206 = vld [vmem:[#allocation2 + $0xe8] sm:$0xf]
    %v207 = vld [vmem:[#allocation2 + $0xec] sm:$0xf]
    %v208 = vld [vmem:[#allocation2 + $0xf0] sm:$0xf]
    %v209 = vld [vmem:[#allocation2 + $0xf4] sm:$0xf]
    %v210 = vld [vmem:[#allocation2 + $0xf8] sm:$0xf]
    %v211 = vld [vmem:[#allocation2 + $0xfc] sm:$0xf]
    %v212 = vld [vmem:[#allocation2 + $0x100] sm:$0xf]
    %v213 = vld [vmem:[#allocation2 + $0x104] sm:$0xf]
    %v214 = vld [vmem:[#allocation2 + $0x108] sm:$0xf]
    %v215 = vld [vmem:[#allocation2 + $0x10c] sm:$0xf]
    %v216 = vld [vmem:[#allocation2 + $0x110] sm:$0xf]
    %v217 = vld [vmem:[#allocation2 + $0x114] sm:$0xf]
    %v218 = vld [vmem:[#allocation2 + $0x118] sm:$0xf]
    %v219 = vld [vmem:[#allocation2 + $0x11c] sm:$0xf]
    %v220 = vld [vmem:[#allocation2 + $0x120] sm:$0xf]
    %v221 = vld [vmem:[#allocation2 + $0x124] sm:$0xf]
    %v222 = vld [vmem:[#allocation2 + $0x128] sm:$0xf]
    %v223 = vld [vmem:[#allocation2 + $0x12c] sm:$0xf]
    %v224 = vld [vmem:[#allocation2 + $0x130] sm:$0xf]
    %v225 = vld [vmem:[#allocation2 + $0x134] sm:$0xf]
    %v226 = vld [vmem:[#allocation2 + $0x138] sm:$0xf]
    %v227 = vld [vmem:[#allocation2 + $0x13c] sm:$0xf]
    %v228 = vld [vmem:[#allocation2 + $0x140] sm:$0xf]
    %v229 = vld [vmem:[#allocation2 + $0x144] sm:$0xf]
    %v230 = vld [vmem:[#allocation2 + $0x148] sm:$0xf]
    %v231 = vld [vmem:[#allocation2 + $0x14c] sm:$0xf]
    %v232 = vld [vmem:[#allocation2 + $0x150] sm:$0xf]
    %v233 = vld [vmem:[#allocation2 + $0x154] sm:$0xf]
    %v234 = vld [vmem:[#allocation2 + $0x158] sm:$0xf]
    %v235 = vld [vmem:[#allocation2 + $0x15c] sm:$0xf]
    %v236 = vld [vmem:[#allocation2 + $0x160] sm:$0xf]
    %v237 = vld [vmem:[#allocation2 + $0x164] sm:$0xf]
    %v238 = vld [vmem:[#allocation2 + $0x168] sm:$0xf]
    %v239 = vld [vmem:[#allocation2 + $0x16c] sm:$0xf]
    %v240 = vld [vmem:[#allocation2 + $0x170] sm:$0xf]
    %v241 = vld [vmem:[#allocation2 + $0x174] sm:$0xf]
    %v242 = vld [vmem:[#allocation2 + $0x178] sm:$0xf]
    %v243 = vld [vmem:[#allocation2 + $0x17c] sm:$0xf]
    %v244 = vld [vmem:[#allocation2 + $0x180] sm:$0xf]
    %v245 = vld [vmem:[#allocation2 + $0x184] sm:$0xf]
    %v246 = vld [vmem:[%s3] sm:$0x1]
    %v247 = vlaneseq
    %v248 = vshrl.u32 %v247, 7
    %v249 = vsub.s32 0, %v248
    %v250 = vrot.slane %v246, %v249
    %v349 = vunpack.c.l.b16 %v148
    %v350 = vunpack.c.l.b16 %v149
    %v351 = vunpack.c.l.b16 %v150
    %v352 = vunpack.c.l.b16 %v151
    %v353 = vunpack.c.l.b16 %v152
    %v354 = vunpack.c.l.b16 %v153
    %v355 = vunpack.c.l.b16 %v154
    %v356 = vunpack.c.l.b16 %v155
    %v357 = vunpack.c.l.b16 %v156
    %v358 = vunpack.c.l.b16 %v157
    %v359 = vunpack.c.l.b16 %v158
    %v360 = vunpack.c.l.b16 %v159
    %v361 = vunpack.c.l.b16 %v160
    %v362 = vunpack.c.l.b16 %v161
    %v363 = vunpack.c.l.b16 %v162
    %v364 = vunpack.c.l.b16 %v163
    %v365 = vunpack.c.l.b16 %v164
    %v366 = vunpack.c.l.b16 %v165
    %v367 = vunpack.c.l.b16 %v166
    %v368 = vunpack.c.l.b16 %v167
    %v369 = vunpack.c.l.b16 %v168
    %v370 = vunpack.c.l.b16 %v169
    %v371 = vunpack.c.l.b16 %v170
    %v372 = vunpack.c.l.b16 %v171
    %v373 = vunpack.c.l.b16 %v172
    %v374 = vunpack.c.l.b16 %v173
    %v375 = vunpack.c.l.b16 %v174
    %v376 = vunpack.c.l.b16 %v175
    %v377 = vunpack.c.l.b16 %v176
    %v378 = vunpack.c.l.b16 %v177
    %v379 = vunpack.c.l.b16 %v178
    %v380 = vunpack.c.l.b16 %v179
    %v381 = vunpack.c.l.b16 %v180
    %v382 = vunpack.c.l.b16 %v181
    %v383 = vunpack.c.l.b16 %v182
    %v384 = vunpack.c.l.b16 %v183
    %v385 = vunpack.c.l.b16 %v184
    %v386 = vunpack.c.l.b16 %v185
    %v387 = vunpack.c.l.b16 %v186
    %v388 = vunpack.c.l.b16 %v187
    %v389 = vunpack.c.l.b16 %v188
    %v390 = vunpack.c.l.b16 %v189
    %v391 = vunpack.c.l.b16 %v190
    %v392 = vunpack.c.l.b16 %v191
    %v393 = vunpack.c.l.b16 %v192
    %v394 = vunpack.c.l.b16 %v193
    %v395 = vunpack.c.l.b16 %v194
    %v396 = vunpack.c.l.b16 %v195
    %v397 = vunpack.c.l.b16 %v196
    %v398 = vunpack.c.l.b16 %v197
    %v399 = vunpack.c.l.b16 %v198
    %v400 = vunpack.c.l.b16 %v199
    %v401 = vunpack.c.l.b16 %v200
    %v402 = vunpack.c.l.b16 %v201
    %v403 = vunpack.c.l.b16 %v202
    %v404 = vunpack.c.l.b16 %v203
    %v405 = vunpack.c.l.b16 %v204
    %v406 = vunpack.c.l.b16 %v205
    %v407 = vunpack.c.l.b16 %v206
    %v408 = vunpack.c.l.b16 %v207
    %v409 = vunpack.c.l.b16 %v208
    %v410 = vunpack.c.l.b16 %v209
    %v411 = vunpack.c.l.b16 %v210
    %v412 = vunpack.c.l.b16 %v211
    %v413 = vunpack.c.l.b16 %v212
    %v414 = vunpack.c.l.b16 %v213
    %v415 = vunpack.c.l.b16 %v214
    %v416 = vunpack.c.l.b16 %v215
    %v417 = vunpack.c.l.b16 %v216
    %v418 = vunpack.c.l.b16 %v217
    %v419 = vunpack.c.l.b16 %v218
    %v420 = vunpack.c.l.b16 %v219
    %v421 = vunpack.c.l.b16 %v220
    %v422 = vunpack.c.l.b16 %v221
    %v423 = vunpack.c.l.b16 %v222
    %v424 = vunpack.c.l.b16 %v223
    %v425 = vunpack.c.l.b16 %v224
    %v426 = vunpack.c.l.b16 %v225
    %v427 = vunpack.c.l.b16 %v226
    %v428 = vunpack.c.l.b16 %v227
    %v429 = vunpack.c.l.b16 %v228
    %v430 = vunpack.c.l.b16 %v229
    %v431 = vunpack.c.l.b16 %v230
    %v432 = vunpack.c.l.b16 %v231
    %v433 = vunpack.c.l.b16 %v232
    %v434 = vunpack.c.l.b16 %v233
    %v435 = vunpack.c.l.b16 %v234
    %v436 = vunpack.c.l.b16 %v235
    %v437 = vunpack.c.l.b16 %v236
    %v438 = vunpack.c.l.b16 %v237
    %v439 = vunpack.c.l.b16 %v238
    %v440 = vunpack.c.l.b16 %v239
    %v441 = vunpack.c.l.b16 %v240
    %v442 = vunpack.c.l.b16 %v241
    %v443 = vunpack.c.l.b16 %v242
    %v444 = vunpack.c.l.b16 %v243
    %v445 = vunpack.c.l.b16 %v244
    %v446 = vunpack.c.l.b16 %v245
    %v447 = vpack.c.b16 %v350, %v349
    %v448 = vpack.c.b16 %v352, %v351
    %v449 = vpack.c.b16 %v354, %v353
    %v450 = vpack.c.b16 %v356, %v355
    %v451 = vpack.c.b16 %v358, %v357
    %v452 = vpack.c.b16 %v360, %v359
    %v453 = vpack.c.b16 %v362, %v361
    %v454 = vpack.c.b16 %v364, %v363
    %v455 = vpack.c.b16 %v366, %v365
    %v456 = vpack.c.b16 %v368, %v367
    %v457 = vpack.c.b16 %v370, %v369
    %v458 = vpack.c.b16 %v372, %v371
    %v459 = vpack.c.b16 %v374, %v373
    %v460 = vpack.c.b16 %v376, %v375
    %v461 = vpack.c.b16 %v378, %v377
    %v462 = vpack.c.b16 %v380, %v379
    %v463 = vpack.c.b16 %v382, %v381
    %v464 = vpack.c.b16 %v384, %v383
    %v465 = vpack.c.b16 %v386, %v385
    %v466 = vpack.c.b16 %v388, %v387
    %v467 = vpack.c.b16 %v390, %v389
    %v468 = vpack.c.b16 %v392, %v391
    %v469 = vpack.c.b16 %v394, %v393
    %v470 = vpack.c.b16 %v396, %v395
    %v471 = vpack.c.b16 %v398, %v397
    %v472 = vpack.c.b16 %v400, %v399
    %v473 = vpack.c.b16 %v402, %v401
    %v474 = vpack.c.b16 %v404, %v403
    %v475 = vpack.c.b16 %v406, %v405
    %v476 = vpack.c.b16 %v408, %v407
    %v477 = vpack.c.b16 %v410, %v409
    %v478 = vpack.c.b16 %v412, %v411
    %v479 = vpack.c.b16 %v414, %v413
    %v480 = vpack.c.b16 %v416, %v415
    %v481 = vpack.c.b16 %v418, %v417
    %v482 = vpack.c.b16 %v420, %v419
    %v483 = vpack.c.b16 %v422, %v421
    %v484 = vpack.c.b16 %v424, %v423
    %v485 = vpack.c.b16 %v426, %v425
    %v486 = vpack.c.b16 %v428, %v427
    %v487 = vpack.c.b16 %v430, %v429
    %v488 = vpack.c.b16 %v432, %v431
    %v489 = vpack.c.b16 %v434, %v433
    %v490 = vpack.c.b16 %v436, %v435
    %v491 = vpack.c.b16 %v438, %v437
    %v492 = vpack.c.b16 %v440, %v439
    %v493 = vpack.c.b16 %v442, %v441
    %v494 = vpack.c.b16 %v444, %v443
    %v495 = vpack.c.b16 %v446, %v445
    %vm545 = vcmask 130048
    %v547 = vsel %vm545, %v147, 0
    %549 = vmatprep.subr.bf16.mxu0 0
    %550 = vmatpush1.bf16.msra.mxu0 %v447
    %551 = vmatprep.subr.bf16.mxu0 0
    %552 = vmatpush1.bf16.msra.mxu0 %v448
    %553 = vmatprep.subr.bf16.mxu0 0
    %554 = vmatpush1.bf16.msra.mxu0 %v449
    %555 = vmatprep.subr.bf16.mxu0 0
    %556 = vmatpush1.bf16.msra.mxu0 %v450
    %557 = vmatprep.subr.bf16.mxu0 0
    %558 = vmatpush1.bf16.msra.mxu0 %v451
    %559 = vmatprep.subr.bf16.mxu0 0
    %560 = vmatpush1.bf16.msra.mxu0 %v452
    %561 = vmatprep.subr.bf16.mxu0 0
    %562 = vmatpush1.bf16.msra.mxu0 %v453
    %563 = vmatprep.subr.bf16.mxu0 0
    %564 = vmatpush1.bf16.msra.mxu0 %v454
    %565 = vmatprep.subr.bf16.mxu0 0
    %566 = vmatpush1.bf16.msra.mxu0 %v455
    %567 = vmatprep.subr.bf16.mxu0 0
    %568 = vmatpush1.bf16.msra.mxu0 %v456
    %569 = vmatprep.subr.bf16.mxu0 0
    %570 = vmatpush1.bf16.msra.mxu0 %v457
    %571 = vmatprep.subr.bf16.mxu0 0
    %572 = vmatpush1.bf16.msra.mxu0 %v458
    %573 = vmatprep.subr.bf16.mxu0 0
    %574 = vmatpush1.bf16.msra.mxu0 %v459
    %575 = vmatprep.subr.bf16.mxu0 0
    %576 = vmatpush1.bf16.msra.mxu0 %v460
    %577 = vmatprep.subr.bf16.mxu0 0
    %578 = vmatpush1.bf16.msra.mxu0 %v461
    %579 = vmatprep.subr.bf16.mxu0 0
    %580 = vmatpush1.bf16.msra.mxu0 %v462
    %581 = vmatprep.mubr.bf16.mxu0 %v142
    %582 = vmatmul.mubr.bf16.gmra.mrb[0].mxu0 %v141
    %v583 = vpop.f32.mrb[0].mxu0
    %v584 = vadd.f32 %v250, %v583
    %v585 = vpop.f32.mrb[0].mxu0
    %v586 = vpop.f32.mrb[0].mxu0
    %v587 = vpop.f32.mrb[0].mxu0
    %588 = vdwg.mxu0
    %589 = vmatprep.subr.bf16.mxu0 0
    %590 = vmatpush1.bf16.msra.mxu0 %v463
    %591 = vmatprep.subr.bf16.mxu0 0
    %592 = vmatpush1.bf16.msra.mxu0 %v464
    %593 = vmatprep.subr.bf16.mxu0 0
    %594 = vmatpush1.bf16.msra.mxu0 %v465
    %595 = vmatprep.subr.bf16.mxu0 0
    %596 = vmatpush1.bf16.msra.mxu0 %v466
    %597 = vmatprep.subr.bf16.mxu0 0
    %598 = vmatpush1.bf16.msra.mxu0 %v467
    %599 = vmatprep.subr.bf16.mxu0 0
    %600 = vmatpush1.bf16.msra.mxu0 %v468
    %601 = vmatprep.subr.bf16.mxu0 0
    %602 = vmatpush1.bf16.msra.mxu0 %v469
    %603 = vmatprep.subr.bf16.mxu0 0
    %604 = vmatpush1.bf16.msra.mxu0 %v470
    %605 = vmatprep.subr.bf16.mxu0 0
    %606 = vmatpush1.bf16.msra.mxu0 %v471
    %607 = vmatprep.subr.bf16.mxu0 0
    %608 = vmatpush1.bf16.msra.mxu0 %v472
    %609 = vmatprep.subr.bf16.mxu0 0
    %610 = vmatpush1.bf16.msra.mxu0 %v473
    %611 = vmatprep.subr.bf16.mxu0 0
    %612 = vmatpush1.bf16.msra.mxu0 %v474
    %613 = vmatprep.subr.bf16.mxu0 0
    %614 = vmatpush1.bf16.msra.mxu0 %v475
    %615 = vmatprep.subr.bf16.mxu0 0
    %616 = vmatpush1.bf16.msra.mxu0 %v476
    %617 = vmatprep.subr.bf16.mxu0 0
    %618 = vmatpush1.bf16.msra.mxu0 %v477
    %619 = vmatprep.subr.bf16.mxu0 0
    %620 = vmatpush1.bf16.msra.mxu0 %v478
    %621 = vmatprep.mubr.bf16.mxu0 %v144
    %622 = vmatmul.mubr.bf16.gmra.mrb[0].mxu0 %v143
    %v623 = vpop.f32.mrb[0].mxu0
    %v624 = vadd.f32 %v584, %v623
    %v625 = vpop.f32.mrb[0].mxu0
    %v626 = vpop.f32.mrb[0].mxu0
    %v627 = vpop.f32.mrb[0].mxu0
    %628 = vdwg.mxu0
    %629 = vmatprep.subr.bf16.mxu0 0
    %630 = vmatpush1.bf16.msra.mxu0 %v479
    %631 = vmatprep.subr.bf16.mxu0 0
    %632 = vmatpush1.bf16.msra.mxu0 %v480
    %633 = vmatprep.subr.bf16.mxu0 0
    %634 = vmatpush1.bf16.msra.mxu0 %v481
    %635 = vmatprep.subr.bf16.mxu0 0
    %636 = vmatpush1.bf16.msra.mxu0 %v482
    %637 = vmatprep.subr.bf16.mxu0 0
    %638 = vmatpush1.bf16.msra.mxu0 %v483
    %639 = vmatprep.subr.bf16.mxu0 0
    %640 = vmatpush1.bf16.msra.mxu0 %v484
    %641 = vmatprep.subr.bf16.mxu0 0
    %642 = vmatpush1.bf16.msra.mxu0 %v485
    %643 = vmatprep.subr.bf16.mxu0 0
    %644 = vmatpush1.bf16.msra.mxu0 %v486
    %645 = vmatprep.subr.bf16.mxu0 0
    %646 = vmatpush1.bf16.msra.mxu0 %v487
    %647 = vmatprep.subr.bf16.mxu0 0
    %648 = vmatpush1.bf16.msra.mxu0 %v488
    %649 = vmatprep.subr.bf16.mxu0 0
    %650 = vmatpush1.bf16.msra.mxu0 %v489
    %651 = vmatprep.subr.bf16.mxu0 0
    %652 = vmatpush1.bf16.msra.mxu0 %v490
    %653 = vmatprep.subr.bf16.mxu0 0
    %654 = vmatpush1.bf16.msra.mxu0 %v491
    %655 = vmatprep.subr.bf16.mxu0 0
    %656 = vmatpush1.bf16.msra.mxu0 %v492
    %657 = vmatprep.subr.bf16.mxu0 0
    %658 = vmatpush1.bf16.msra.mxu0 %v493
    %659 = vmatprep.subr.bf16.mxu0 0
    %660 = vmatpush1.bf16.msra.mxu0 %v494
    %661 = vmatprep.mubr.bf16.mxu0 %v146
    %662 = vmatmul.mubr.bf16.gmra.mrb[0].mxu0 %v145
    %v663 = vpop.f32.mrb[0].mxu0
    %v664 = vadd.f32 %v624, %v663
    %v665 = vpop.f32.mrb[0].mxu0
    %v666 = vpop.f32.mrb[0].mxu0
    %v667 = vpop.f32.mrb[0].mxu0
    %668 = vdwg.mxu0
    %669 = vmatprep.subr.bf16.mxu0 0
    %670 = vmatpush1.bf16.msra.mxu0 %v495
    %671 = vmatprep.subr.bf16.mxu0 0
    %672 = vmatpush1.bf16.msra.mxu0 0
    %673 = vmatprep.subr.bf16.mxu0 0
    %674 = vmatpush1.bf16.msra.mxu0 0
    %675 = vmatprep.subr.bf16.mxu0 0
    %676 = vmatpush1.bf16.msra.mxu0 0
    %677 = vmatprep.subr.bf16.mxu0 0
    %678 = vmatpush1.bf16.msra.mxu0 0
    %679 = vmatprep.subr.bf16.mxu0 0
    %680 = vmatpush1.bf16.msra.mxu0 0
    %681 = vmatprep.subr.bf16.mxu0 0
    %682 = vmatpush1.bf16.msra.mxu0 0
    %683 = vmatprep.subr.bf16.mxu0 0
    %684 = vmatpush1.bf16.msra.mxu0 0
    %685 = vmatprep.subr.bf16.mxu0 0
    %686 = vmatpush1.bf16.msra.mxu0 0
    %687 = vmatprep.subr.bf16.mxu0 0
    %688 = vmatpush1.bf16.msra.mxu0 0
    %689 = vmatprep.subr.bf16.mxu0 0
    %690 = vmatpush1.bf16.msra.mxu0 0
    %691 = vmatprep.subr.bf16.mxu0 0
    %692 = vmatpush1.bf16.msra.mxu0 0
    %693 = vmatprep.subr.bf16.mxu0 0
    %694 = vmatpush1.bf16.msra.mxu0 0
    %695 = vmatprep.subr.bf16.mxu0 0
    %696 = vmatpush1.bf16.msra.mxu0 0
    %697 = vmatprep.subr.bf16.mxu0 0
    %698 = vmatpush1.bf16.msra.mxu0 0
    %699 = vmatprep.subr.bf16.mxu0 0
    %700 = vmatpush1.bf16.msra.mxu0 0
    %701 = vmatprep.mubr.bf16.mxu0 0
    %702 = vmatmul.mubr.bf16.gmra.mrb[0].mxu0 %v547
    %v703 = vpop.f32.mrb[0].mxu0
    %v704 = vadd.f32 %v664, %v703
    %v705 = vpop.f32.mrb[0].mxu0
    %v706 = vpop.f32.mrb[0].mxu0
    %v707 = vpop.f32.mrb[0].mxu0
    %708 = vdwg.mxu0
    %v709 = vmax.f32 %v704, 0.0
    %v710 = vpack.c.bf16 %v709, %v709
    %v711 = vld [vmem:[#allocation5] sm:$0xf]
    %v712 = vld [vmem:[#allocation5 + $0x4] sm:$0xf]
    %v713 = vld [vmem:[#allocation5 + $0x8] sm:$0xf]
    %v714 = vld [vmem:[#allocation5 + $0xc] sm:$0xf]
    %v715 = vld [vmem:[#allocation5 + $0x10] sm:$0xf]
    %v716 = vld [vmem:[#allocation5 + $0x14] sm:$0xf]
    %v717 = vld [vmem:[#allocation5 + $0x18] sm:$0xf]
    %v718 = vld [vmem:[#allocation5 + $0x1c] sm:$0xf]
    %v719 = vld [vmem:[#allocation5 + $0x20] sm:$0xf]
    %v720 = vld [vmem:[#allocation5 + $0x24] sm:$0xf]
    %v721 = vld [vmem:[#allocation5 + $0x28] sm:$0xf]
    %v722 = vld [vmem:[#allocation5 + $0x2c] sm:$0xf]
    %v723 = vld [vmem:[#allocation5 + $0x30] sm:$0xf]
    %v724 = vld [vmem:[#allocation5 + $0x34] sm:$0xf]
    %v725 = vld [vmem:[#allocation5 + $0x38] sm:$0xf]
    %v726 = vld [vmem:[#allocation5 + $0x3c] sm:$0xf]
    %v727 = vld [vmem:[%s3 + $0x1] sm:$0x1]
    %v728 = vlaneseq
    %v729 = vshrl.u32 %v728, 7
    %v730 = vsub.s32 0, %v729
    %v731 = vrot.slane %v727, %v730
    %v748 = vunpack.c.l.b16 %v711
    %v749 = vunpack.c.l.b16 %v712
    %v750 = vunpack.c.l.b16 %v713
    %v751 = vunpack.c.l.b16 %v714
    %v752 = vunpack.c.l.b16 %v715
    %v753 = vunpack.c.l.b16 %v716
    %v754 = vunpack.c.l.b16 %v717
    %v755 = vunpack.c.l.b16 %v718
    %v756 = vunpack.c.l.b16 %v719
    %v757 = vunpack.c.l.b16 %v720
    %v758 = vunpack.c.l.b16 %v721
    %v759 = vunpack.c.l.b16 %v722
    %v760 = vunpack.c.l.b16 %v723
    %v761 = vunpack.c.l.b16 %v724
    %v762 = vunpack.c.l.b16 %v725
    %v763 = vunpack.c.l.b16 %v726
    %v764 = vpack.c.b16 %v749, %v748
    %v765 = vpack.c.b16 %v751, %v750
    %v766 = vpack.c.b16 %v753, %v752
    %v767 = vpack.c.b16 %v755, %v754
    %v768 = vpack.c.b16 %v757, %v756
    %v769 = vpack.c.b16 %v759, %v758
    %v770 = vpack.c.b16 %v761, %v760
    %v771 = vpack.c.b16 %v763, %v762
    %780 = vmatprep.subr.bf16.mxu0 0
    %781 = vmatpush1.bf16.msra.mxu0 %v764
    %782 = vmatprep.subr.bf16.mxu0 0
    %783 = vmatpush1.bf16.msra.mxu0 %v765
    %784 = vmatprep.subr.bf16.mxu0 0
    %785 = vmatpush1.bf16.msra.mxu0 %v766
    %786 = vmatprep.subr.bf16.mxu0 0
    %787 = vmatpush1.bf16.msra.mxu0 %v767
    %788 = vmatprep.subr.bf16.mxu0 0
    %789 = vmatpush1.bf16.msra.mxu0 %v768
    %790 = vmatprep.subr.bf16.mxu0 0
    %791 = vmatpush1.bf16.msra.mxu0 %v769
    %792 = vmatprep.subr.bf16.mxu0 0
    %793 = vmatpush1.bf16.msra.mxu0 %v770
    %794 = vmatprep.subr.bf16.mxu0 0
    %795 = vmatpush1.bf16.msra.mxu0 %v771
    %796 = vmatprep.subr.bf16.mxu0 0
    %797 = vmatpush1.bf16.msra.mxu0 0
    %798 = vmatprep.subr.bf16.mxu0 0
    %799 = vmatpush1.bf16.msra.mxu0 0
    %800 = vmatprep.subr.bf16.mxu0 0
    %801 = vmatpush1.bf16.msra.mxu0 0
    %802 = vmatprep.subr.bf16.mxu0 0
    %803 = vmatpush1.bf16.msra.mxu0 0
    %804 = vmatprep.subr.bf16.mxu0 0
    %805 = vmatpush1.bf16.msra.mxu0 0
    %806 = vmatprep.subr.bf16.mxu0 0
    %807 = vmatpush1.bf16.msra.mxu0 0
    %808 = vmatprep.subr.bf16.mxu0 0
    %809 = vmatpush1.bf16.msra.mxu0 0
    %810 = vmatprep.subr.bf16.mxu0 0
    %811 = vmatpush1.bf16.msra.mxu0 0
    %812 = vmatprep.mubr.bf16.mxu0 0
    %813 = vmatmul.mubr.bf16.gmra.mrb[0].mxu0 %v710
    %v814 = vpop.f32.mrb[0].mxu0
    %v815 = vadd.f32 %v731, %v814
    %v816 = vpop.f32.mrb[0].mxu0
    %v817 = vpop.f32.mrb[0].mxu0
    %v818 = vpop.f32.mrb[0].mxu0
    %819 = vdwg.mxu0
    %v820 = vmax.f32 %v815, 0.0
    %v821 = vpack.c.bf16 %v820, %v820
    %s822 = scalar_lea.vmem [#allocation5], 64
    %v823 = vld [vmem:[%s822] sm:$0xf]
    %v824 = vld [vmem:[%s822 + $0x4] sm:$0xf]
    %v825 = vld [vmem:[%s822 + $0x8] sm:$0xf]
    %v826 = vld [vmem:[%s822 + $0xc] sm:$0xf]
    %v827 = vld [vmem:[%s822 + $0x10] sm:$0xf]
    %v828 = vld [vmem:[%s822 + $0x14] sm:$0xf]
    %v829 = vld [vmem:[%s822 + $0x18] sm:$0xf]
    %v830 = vld [vmem:[%s822 + $0x1c] sm:$0xf]
    %v831 = vld [vmem:[%s822 + $0x20] sm:$0xf]
    %v832 = vld [vmem:[%s822 + $0x24] sm:$0xf]
    %v833 = vld [vmem:[%s822 + $0x28] sm:$0xf]
    %v834 = vld [vmem:[%s822 + $0x2c] sm:$0xf]
    %v835 = vld [vmem:[%s822 + $0x30] sm:$0xf]
    %v836 = vld [vmem:[%s822 + $0x34] sm:$0xf]
    %v837 = vld [vmem:[%s822 + $0x38] sm:$0xf]
    %v838 = vld [vmem:[%s822 + $0x3c] sm:$0xf]
    %v839 = vld [vmem:[%s3 + $0x2] sm:$0x1]
    %v840 = vlaneseq
    %v841 = vshrl.u32 %v840, 7
    %v842 = vsub.s32 0, %v841
    %v843 = vrot.slane %v839, %v842
    %v860 = vunpack.c.l.b16 %v823
    %v861 = vunpack.c.l.b16 %v824
    %v862 = vunpack.c.l.b16 %v825
    %v863 = vunpack.c.l.b16 %v826
    %v864 = vunpack.c.l.b16 %v827
    %v865 = vunpack.c.l.b16 %v828
    %v866 = vunpack.c.l.b16 %v829
    %v867 = vunpack.c.l.b16 %v830
    %v868 = vunpack.c.l.b16 %v831
    %v869 = vunpack.c.l.b16 %v832
    %v870 = vunpack.c.l.b16 %v833
    %v871 = vunpack.c.l.b16 %v834
    %v872 = vunpack.c.l.b16 %v835
    %v873 = vunpack.c.l.b16 %v836
    %v874 = vunpack.c.l.b16 %v837
    %v875 = vunpack.c.l.b16 %v838
    %v876 = vpack.c.b16 %v861, %v860
    %v877 = vpack.c.b16 %v863, %v862
    %v878 = vpack.c.b16 %v865, %v864
    %v879 = vpack.c.b16 %v867, %v866
    %v880 = vpack.c.b16 %v869, %v868
    %v881 = vpack.c.b16 %v871, %v870
    %v882 = vpack.c.b16 %v873, %v872
    %v883 = vpack.c.b16 %v875, %v874
    %892 = vmatprep.subr.bf16.mxu0 0
    %893 = vmatpush1.bf16.msra.mxu0 %v876
    %894 = vmatprep.subr.bf16.mxu0 0
    %895 = vmatpush1.bf16.msra.mxu0 %v877
    %896 = vmatprep.subr.bf16.mxu0 0
    %897 = vmatpush1.bf16.msra.mxu0 %v878
    %898 = vmatprep.subr.bf16.mxu0 0
    %899 = vmatpush1.bf16.msra.mxu0 %v879
    %900 = vmatprep.subr.bf16.mxu0 0
    %901 = vmatpush1.bf16.msra.mxu0 %v880
    %902 = vmatprep.subr.bf16.mxu0 0
    %903 = vmatpush1.bf16.msra.mxu0 %v881
    %904 = vmatprep.subr.bf16.mxu0 0
    %905 = vmatpush1.bf16.msra.mxu0 %v882
    %906 = vmatprep.subr.bf16.mxu0 0
    %907 = vmatpush1.bf16.msra.mxu0 %v883
    %908 = vmatprep.subr.bf16.mxu0 0
    %909 = vmatpush1.bf16.msra.mxu0 0
    %910 = vmatprep.subr.bf16.mxu0 0
    %911 = vmatpush1.bf16.msra.mxu0 0
    %912 = vmatprep.subr.bf16.mxu0 0
    %913 = vmatpush1.bf16.msra.mxu0 0
    %914 = vmatprep.subr.bf16.mxu0 0
    %915 = vmatpush1.bf16.msra.mxu0 0
    %916 = vmatprep.subr.bf16.mxu0 0
    %917 = vmatpush1.bf16.msra.mxu0 0
    %918 = vmatprep.subr.bf16.mxu0 0
    %919 = vmatpush1.bf16.msra.mxu0 0
    %920 = vmatprep.subr.bf16.mxu0 0
    %921 = vmatpush1.bf16.msra.mxu0 0
    %922 = vmatprep.subr.bf16.mxu0 0
    %923 = vmatpush1.bf16.msra.mxu0 0
    %924 = vmatprep.mubr.bf16.mxu0 0
    %925 = vmatmul.mubr.bf16.gmra.mrb[0].mxu0 %v821
    %v926 = vpop.f32.mrb[0].mxu0
    %v927 = vadd.f32 %v843, %v926
    %v928 = vpop.f32.mrb[0].mxu0
    %v929 = vpop.f32.mrb[0].mxu0
    %v930 = vpop.f32.mrb[0].mxu0
    %931 = vdwg.mxu0
    %v932 = vmax.f32 %v927, 0.0
    %v933 = vpack.c.bf16 %v932, %v932
    %s934 = scalar_lea.vmem [#allocation5], 128
    %v935 = vld [vmem:[%s934] sm:$0xf]
    %v936 = vld [vmem:[%s934 + $0x4] sm:$0xf]
    %v937 = vld [vmem:[%s934 + $0x8] sm:$0xf]
    %v938 = vld [vmem:[%s934 + $0xc] sm:$0xf]
    %v939 = vld [vmem:[%s934 + $0x10] sm:$0xf]
    %v940 = vld [vmem:[%s934 + $0x14] sm:$0xf]
    %v941 = vld [vmem:[%s934 + $0x18] sm:$0xf]
    %v942 = vld [vmem:[%s934 + $0x1c] sm:$0xf]
    %v943 = vld [vmem:[%s934 + $0x20] sm:$0xf]
    %v944 = vld [vmem:[%s934 + $0x24] sm:$0xf]
    %v945 = vld [vmem:[%s934 + $0x28] sm:$0xf]
    %v946 = vld [vmem:[%s934 + $0x2c] sm:$0xf]
    %v947 = vld [vmem:[%s934 + $0x30] sm:$0xf]
    %v948 = vld [vmem:[%s934 + $0x34] sm:$0xf]
    %v949 = vld [vmem:[%s934 + $0x38] sm:$0xf]
    %v950 = vld [vmem:[%s934 + $0x3c] sm:$0xf]
    %v951 = vld [vmem:[%s3 + $0x3] sm:$0x1]
    %v952 = vlaneseq
    %v953 = vshrl.u32 %v952, 7
    %v954 = vsub.s32 0, %v953
    %v955 = vrot.slane %v951, %v954
    %v972 = vunpack.c.l.b16 %v935
    %v973 = vunpack.c.l.b16 %v936
    %v974 = vunpack.c.l.b16 %v937
    %v975 = vunpack.c.l.b16 %v938
    %v976 = vunpack.c.l.b16 %v939
    %v977 = vunpack.c.l.b16 %v940
    %v978 = vunpack.c.l.b16 %v941
    %v979 = vunpack.c.l.b16 %v942
    %v980 = vunpack.c.l.b16 %v943
    %v981 = vunpack.c.l.b16 %v944
    %v982 = vunpack.c.l.b16 %v945
    %v983 = vunpack.c.l.b16 %v946
    %v984 = vunpack.c.l.b16 %v947
    %v985 = vunpack.c.l.b16 %v948
    %v986 = vunpack.c.l.b16 %v949
    %v987 = vunpack.c.l.b16 %v950
    %v988 = vpack.c.b16 %v973, %v972
    %v989 = vpack.c.b16 %v975, %v974
    %v990 = vpack.c.b16 %v977, %v976
    %v991 = vpack.c.b16 %v979, %v978
    %v992 = vpack.c.b16 %v981, %v980
    %v993 = vpack.c.b16 %v983, %v982
    %v994 = vpack.c.b16 %v985, %v984
    %v995 = vpack.c.b16 %v987, %v986
    %1004 = vmatprep.subr.bf16.mxu0 0
    %1005 = vmatpush1.bf16.msra.mxu0 %v988
    %1006 = vmatprep.subr.bf16.mxu0 0
    %1007 = vmatpush1.bf16.msra.mxu0 %v989
    %1008 = vmatprep.subr.bf16.mxu0 0
    %1009 = vmatpush1.bf16.msra.mxu0 %v990
    %1010 = vmatprep.subr.bf16.mxu0 0
    %1011 = vmatpush1.bf16.msra.mxu0 %v991
    %1012 = vmatprep.subr.bf16.mxu0 0
    %1013 = vmatpush1.bf16.msra.mxu0 %v992
    %1014 = vmatprep.subr.bf16.mxu0 0
    %1015 = vmatpush1.bf16.msra.mxu0 %v993
    %1016 = vmatprep.subr.bf16.mxu0 0
    %1017 = vmatpush1.bf16.msra.mxu0 %v994
    %1018 = vmatprep.subr.bf16.mxu0 0
    %1019 = vmatpush1.bf16.msra.mxu0 %v995
    %1020 = vmatprep.subr.bf16.mxu0 0
    %1021 = vmatpush1.bf16.msra.mxu0 0
    %1022 = vmatprep.subr.bf16.mxu0 0
    %1023 = vmatpush1.bf16.msra.mxu0 0
    %1024 = vmatprep.subr.bf16.mxu0 0
    %1025 = vmatpush1.bf16.msra.mxu0 0
    %1026 = vmatprep.subr.bf16.mxu0 0
    %1027 = vmatpush1.bf16.msra.mxu0 0
    %1028 = vmatprep.subr.bf16.mxu0 0
    %1029 = vmatpush1.bf16.msra.mxu0 0
    %1030 = vmatprep.subr.bf16.mxu0 0
    %1031 = vmatpush1.bf16.msra.mxu0 0
    %1032 = vmatprep.subr.bf16.mxu0 0
    %1033 = vmatpush1.bf16.msra.mxu0 0
    %1034 = vmatprep.subr.bf16.mxu0 0
    %1035 = vmatpush1.bf16.msra.mxu0 0
    %1036 = vmatprep.mubr.bf16.mxu0 0
    %1037 = vmatmul.mubr.bf16.gmra.mrb[0].mxu0 %v933
    %v1038 = vpop.f32.mrb[0].mxu0
    %v1039 = vadd.f32 %v955, %v1038
    %v1040 = vpop.f32.mrb[0].mxu0
    %v1041 = vpop.f32.mrb[0].mxu0
    %v1042 = vpop.f32.mrb[0].mxu0
    %1043 = vdwg.mxu0
    %v1044 = vmax.f32 %v1039, 0.0
    %v1045 = vpack.c.bf16 %v1044, %v1044
    %s1046 = scalar_lea.vmem [#allocation5], 192
    %v1047 = vld [vmem:[%s1046] sm:$0xf]
    %v1048 = vld [vmem:[%s1046 + $0x4] sm:$0xf]
    %v1049 = vld [vmem:[%s1046 + $0x8] sm:$0xf]
    %v1050 = vld [vmem:[%s1046 + $0xc] sm:$0xf]
    %v1051 = vld [vmem:[%s1046 + $0x10] sm:$0xf]
    %v1052 = vld [vmem:[%s1046 + $0x14] sm:$0xf]
    %v1053 = vld [vmem:[%s1046 + $0x18] sm:$0xf]
    %v1054 = vld [vmem:[%s1046 + $0x1c] sm:$0xf]
    %v1055 = vld [vmem:[%s1046 + $0x20] sm:$0xf]
    %v1056 = vld [vmem:[%s1046 + $0x24] sm:$0xf]
    %v1057 = vld [vmem:[%s1046 + $0x28] sm:$0xf]
    %v1058 = vld [vmem:[%s1046 + $0x2c] sm:$0xf]
    %v1059 = vld [vmem:[%s1046 + $0x30] sm:$0xf]
    %v1060 = vld [vmem:[%s1046 + $0x34] sm:$0xf]
    %v1061 = vld [vmem:[%s1046 + $0x38] sm:$0xf]
    %v1062 = vld [vmem:[%s1046 + $0x3c] sm:$0xf]
    %v1063 = vld [vmem:[%s3 + $0x4] sm:$0x1]
    %v1064 = vlaneseq
    %v1065 = vshrl.u32 %v1064, 7
    %v1066 = vsub.s32 0, %v1065
    %v1067 = vrot.slane %v1063, %v1066
    %v1084 = vunpack.c.l.b16 %v1047
    %v1085 = vunpack.c.l.b16 %v1048
    %v1086 = vunpack.c.l.b16 %v1049
    %v1087 = vunpack.c.l.b16 %v1050
    %v1088 = vunpack.c.l.b16 %v1051
    %v1089 = vunpack.c.l.b16 %v1052
    %v1090 = vunpack.c.l.b16 %v1053
    %v1091 = vunpack.c.l.b16 %v1054
    %v1092 = vunpack.c.l.b16 %v1055
    %v1093 = vunpack.c.l.b16 %v1056
    %v1094 = vunpack.c.l.b16 %v1057
    %v1095 = vunpack.c.l.b16 %v1058
    %v1096 = vunpack.c.l.b16 %v1059
    %v1097 = vunpack.c.l.b16 %v1060
    %v1098 = vunpack.c.l.b16 %v1061
    %v1099 = vunpack.c.l.b16 %v1062
    %v1100 = vpack.c.b16 %v1085, %v1084
    %v1101 = vpack.c.b16 %v1087, %v1086
    %v1102 = vpack.c.b16 %v1089, %v1088
    %v1103 = vpack.c.b16 %v1091, %v1090
    %v1104 = vpack.c.b16 %v1093, %v1092
    %v1105 = vpack.c.b16 %v1095, %v1094
    %v1106 = vpack.c.b16 %v1097, %v1096
    %v1107 = vpack.c.b16 %v1099, %v1098
    %1116 = vmatprep.subr.bf16.mxu0 0
    %1117 = vmatpush1.bf16.msra.mxu0 %v1100
    %1118 = vmatprep.subr.bf16.mxu0 0
    %1119 = vmatpush1.bf16.msra.mxu0 %v1101
    %1120 = vmatprep.subr.bf16.mxu0 0
    %1121 = vmatpush1.bf16.msra.mxu0 %v1102
    %1122 = vmatprep.subr.bf16.mxu0 0
    %1123 = vmatpush1.bf16.msra.mxu0 %v1103
    %1124 = vmatprep.subr.bf16.mxu0 0
    %1125 = vmatpush1.bf16.msra.mxu0 %v1104
    %1126 = vmatprep.subr.bf16.mxu0 0
    %1127 = vmatpush1.bf16.msra.mxu0 %v1105
    %1128 = vmatprep.subr.bf16.mxu0 0
    %1129 = vmatpush1.bf16.msra.mxu0 %v1106
    %1130 = vmatprep.subr.bf16.mxu0 0
    %1131 = vmatpush1.bf16.msra.mxu0 %v1107
    %1132 = vmatprep.subr.bf16.mxu0 0
    %1133 = vmatpush1.bf16.msra.mxu0 0
    %1134 = vmatprep.subr.bf16.mxu0 0
    %1135 = vmatpush1.bf16.msra.mxu0 0
    %1136 = vmatprep.subr.bf16.mxu0 0
    %1137 = vmatpush1.bf16.msra.mxu0 0
    %1138 = vmatprep.subr.bf16.mxu0 0
    %1139 = vmatpush1.bf16.msra.mxu0 0
    %1140 = vmatprep.subr.bf16.mxu0 0
    %1141 = vmatpush1.bf16.msra.mxu0 0
    %1142 = vmatprep.subr.bf16.mxu0 0
    %1143 = vmatpush1.bf16.msra.mxu0 0
    %1144 = vmatprep.subr.bf16.mxu0 0
    %1145 = vmatpush1.bf16.msra.mxu0 0
    %1146 = vmatprep.subr.bf16.mxu0 0
    %1147 = vmatpush1.bf16.msra.mxu0 0
    %1148 = vmatprep.mubr.bf16.mxu0 0
    %1149 = vmatmul.mubr.bf16.gmra.mrb[0].mxu0 %v1045
    %v1150 = vpop.f32.mrb[0].mxu0
    %v1151 = vadd.f32 %v1067, %v1150
    %v1152 = vpop.f32.mrb[0].mxu0
    %v1153 = vpop.f32.mrb[0].mxu0
    %v1154 = vpop.f32.mrb[0].mxu0
    %1155 = vdwg.mxu0
    %v1156 = vmax.f32 %v1151, 0.0
    %v1157 = vpack.c.bf16 %v1156, %v1156
    %s1158 = scalar_lea.vmem [#allocation5], 256
    %v1159 = vld [vmem:[%s1158] sm:$0xf]
    %v1160 = vld [vmem:[%s1158 + $0x4] sm:$0xf]
    %v1161 = vld [vmem:[%s1158 + $0x8] sm:$0xf]
    %v1162 = vld [vmem:[%s1158 + $0xc] sm:$0xf]
    %v1163 = vld [vmem:[%s1158 + $0x10] sm:$0xf]
    %v1164 = vld [vmem:[%s1158 + $0x14] sm:$0xf]
    %v1165 = vld [vmem:[%s1158 + $0x18] sm:$0xf]
    %v1166 = vld [vmem:[%s1158 + $0x1c] sm:$0xf]
    %v1167 = vld [vmem:[%s1158 + $0x20] sm:$0xf]
    %v1168 = vld [vmem:[%s1158 + $0x24] sm:$0xf]
    %v1169 = vld [vmem:[%s1158 + $0x28] sm:$0xf]
    %v1170 = vld [vmem:[%s1158 + $0x2c] sm:$0xf]
    %v1171 = vld [vmem:[%s1158 + $0x30] sm:$0xf]
    %v1172 = vld [vmem:[%s1158 + $0x34] sm:$0xf]
    %v1173 = vld [vmem:[%s1158 + $0x38] sm:$0xf]
    %v1174 = vld [vmem:[%s1158 + $0x3c] sm:$0xf]
    %v1175 = vld [vmem:[%s3 + $0x5] sm:$0x1]
    %v1176 = vlaneseq
    %v1177 = vshrl.u32 %v1176, 7
    %v1178 = vsub.s32 0, %v1177
    %v1179 = vrot.slane %v1175, %v1178
    %v1196 = vunpack.c.l.b16 %v1159
    %v1197 = vunpack.c.l.b16 %v1160
    %v1198 = vunpack.c.l.b16 %v1161
    %v1199 = vunpack.c.l.b16 %v1162
    %v1200 = vunpack.c.l.b16 %v1163
    %v1201 = vunpack.c.l.b16 %v1164
    %v1202 = vunpack.c.l.b16 %v1165
    %v1203 = vunpack.c.l.b16 %v1166
    %v1204 = vunpack.c.l.b16 %v1167
    %v1205 = vunpack.c.l.b16 %v1168
    %v1206 = vunpack.c.l.b16 %v1169
    %v1207 = vunpack.c.l.b16 %v1170
    %v1208 = vunpack.c.l.b16 %v1171
    %v1209 = vunpack.c.l.b16 %v1172
    %v1210 = vunpack.c.l.b16 %v1173
    %v1211 = vunpack.c.l.b16 %v1174
    %v1212 = vpack.c.b16 %v1197, %v1196
    %v1213 = vpack.c.b16 %v1199, %v1198
    %v1214 = vpack.c.b16 %v1201, %v1200
    %v1215 = vpack.c.b16 %v1203, %v1202
    %v1216 = vpack.c.b16 %v1205, %v1204
    %v1217 = vpack.c.b16 %v1207, %v1206
    %v1218 = vpack.c.b16 %v1209, %v1208
    %v1219 = vpack.c.b16 %v1211, %v1210
    %1228 = vmatprep.subr.bf16.mxu0 0
    %1229 = vmatpush1.bf16.msra.mxu0 %v1212
    %1230 = vmatprep.subr.bf16.mxu0 0
    %1231 = vmatpush1.bf16.msra.mxu0 %v1213
    %1232 = vmatprep.subr.bf16.mxu0 0
    %1233 = vmatpush1.bf16.msra.mxu0 %v1214
    %1234 = vmatprep.subr.bf16.mxu0 0
    %1235 = vmatpush1.bf16.msra.mxu0 %v1215
    %1236 = vmatprep.subr.bf16.mxu0 0
    %1237 = vmatpush1.bf16.msra.mxu0 %v1216
    %1238 = vmatprep.subr.bf16.mxu0 0
    %1239 = vmatpush1.bf16.msra.mxu0 %v1217
    %1240 = vmatprep.subr.bf16.mxu0 0
    %1241 = vmatpush1.bf16.msra.mxu0 %v1218
    %1242 = vmatprep.subr.bf16.mxu0 0
    %1243 = vmatpush1.bf16.msra.mxu0 %v1219
    %1244 = vmatprep.subr.bf16.mxu0 0
    %1245 = vmatpush1.bf16.msra.mxu0 0
    %1246 = vmatprep.subr.bf16.mxu0 0
    %1247 = vmatpush1.bf16.msra.mxu0 0
    %1248 = vmatprep.subr.bf16.mxu0 0
    %1249 = vmatpush1.bf16.msra.mxu0 0
    %1250 = vmatprep.subr.bf16.mxu0 0
    %1251 = vmatpush1.bf16.msra.mxu0 0
    %1252 = vmatprep.subr.bf16.mxu0 0
    %1253 = vmatpush1.bf16.msra.mxu0 0
    %1254 = vmatprep.subr.bf16.mxu0 0
    %1255 = vmatpush1.bf16.msra.mxu0 0
    %1256 = vmatprep.subr.bf16.mxu0 0
    %1257 = vmatpush1.bf16.msra.mxu0 0
    %1258 = vmatprep.subr.bf16.mxu0 0
    %1259 = vmatpush1.bf16.msra.mxu0 0
    %1260 = vmatprep.mubr.bf16.mxu0 0
    %1261 = vmatmul.mubr.bf16.gmra.mrb[0].mxu0 %v1157
    %v1262 = vpop.f32.mrb[0].mxu0
    %v1263 = vadd.f32 %v1179, %v1262
    %v1264 = vpop.f32.mrb[0].mxu0
    %v1265 = vpop.f32.mrb[0].mxu0
    %v1266 = vpop.f32.mrb[0].mxu0
    %1267 = vdwg.mxu0
    %v1268 = vlaneseq
    %v1269 = vand.u32 %v1268, 127
    %vm1270 = vcmp.lt.s32.totalorder %v1269, 10
    %v1271 = vsel %vm1270, %v1263, -1e+30
    %1272 = vmax.xlane.f32.xlu0 %v1271
    %v1273 = vpop.xlane.xlu0 %1272
    %v1274 = vsub.f32 %v1263, %v1273
    %v1275 = vmul.f32 %v1274, 1.442695
    %v1276 = vpow.pop %v1275
    %v1277 = vsel %vm1270, %v1276, 0.0
    %1278 = vadd.xlane.f32.xlu0 %v1277
    %v1279 = vpop.xlane.xlu0 %1278
    %v1280 = vlog2.pop %v1279
    %v1281 = vmul.f32 %v1280, 0.6931472
    %v1282 = vsub.f32 %v1274, %v1281
    %1283 = vst [vmem:[#allocation7] sm:$0xff] %v1282
    // Predicated region
    $region26: #{e_forward.1} parent=1 // pred_check
      _
    $region27: #{e_forward.1} parent=1 // pred_check_branch
      %1285 = sbr.rel (0) target = $region29
    $region28: #{e_forward.1} parent=1 // pred_region
      %s1287 = ssub.s32 128, 32
      %1288 = vsyncadd [#allocation4], %s1287
      %s1289 = sshll.u32 [#allocation7], 4
      %s1290 = int_to_ptr.vmem [resolvable:$true] %s1289
      %1295 = dma.vmem_to_hbm [thread:$0]  %s1290, 32, %s4, [#allocation4], 32, 32, 2
    $region29: #{e_forward.1} parent=1 // pred_fallthru
      _
    // Predicated region
    $region30: #{e_forward.1} parent=1 // pred_check
      _
    $region31: #{e_forward.1} parent=1 // pred_check_branch
      %1297 = sbr.rel (0) target = $region33
    $region32: #{e_forward.1} parent=1 // pred_region
      %1298 = dma.done [#allocation4], 128
    $region33: #{e_forward.1} parent=1 // pred_fallthru
      _
    %1299 = vsyncpa [#allocation3], 1
    %1300 = vsyncpa [#allocation6], 1
    %1301 = vsyncpa [#allocation4], 1

</llo_original>
